<compile_context>
chip_gen: v7x
topology: tpu7x:2x2x1
jax: 0.10.0
libtpu: 0.0.40
codegen_flags: <defaults>
</compile_context>

<pallas_src>
import functools

import jax
import jax.numpy as jnp
from jax import lax
from jax.experimental import pallas as pl
from jax.experimental.pallas import tpu as pltpu


def _concat_pool_kernel(x_ref, max_ref, avg_ref, max_acc, sum_acc, *,
                        hw, tile_cols, mask_cols):
    """Per-row global max + mean over the lane (H*W) axis, tiled over H*W."""
    k = pl.program_id(1)
    nk = pl.num_programs(1)

    @pl.when(k == 0)
    def _init():
        max_acc[...] = jnp.full_like(max_acc, -jnp.inf)
        sum_acc[...] = jnp.zeros_like(sum_acc)

    x = x_ref[...]                      # (tile_rows, tile_cols)
    if mask_cols:
        # Last H*W chunk is ragged: mask out-of-range lanes so they cannot
        # corrupt the max (-inf) or the sum (0).
        col = k * tile_cols + lax.broadcasted_iota(jnp.int32, x.shape, 1)
        valid = col < hw
        x_max = jnp.where(valid, x, jnp.asarray(-jnp.inf, dtype=x.dtype))
        x_sum = jnp.where(valid, x, jnp.asarray(0, dtype=x.dtype))
    else:
        x_max = x
        x_sum = x

    max_acc[...] = jnp.maximum(max_acc[...],
                               jnp.max(x_max, axis=-1, keepdims=True))
    # Accumulate the sum in f32 without materializing a widened copy of the tile.
    sum_acc[...] = sum_acc[...] + jnp.sum(x_sum, axis=-1, keepdims=True,
                                          dtype=jnp.float32)

    @pl.when(k == nk - 1)
    def _finalize():
        max_ref[...] = max_acc[...].astype(max_ref.dtype)
        avg_ref[...] = (sum_acc[...] * (1.0 / hw)).astype(avg_ref.dtype)


def adaptive_concat_pool2d(x, *, block_bytes=4 * 1024 * 1024):
    """Equivalent of AdaptiveConcatPool2d(sz=None): (N, C, H, W) -> (N, 2C, 1, 1)."""
    # TODO(synk): sz != None (true adaptive pooling to an arbitrary output grid)
    # is not implemented; only the module's default global 1x1 pooling is.
    N, C, H, W = x.shape
    R, HW = N * C, H * W
    dtype = x.dtype
    itemsize = jnp.dtype(dtype).itemsize
    sub = max(8, 8 * (4 // itemsize))       # sublane packing: 8 f32, 16 bf16, 32 int8

    x2 = x.reshape(R, HW)

    # ---- row (N*C) tiling: biggest multiple-of-`sub` tile within block_bytes ----
    rows_fit = max(1, block_bytes // (HW * itemsize))
    tile_rows = max(sub, (rows_fit // sub) * sub)
    if tile_rows >= R:
        tile_rows = R                        # full extent always satisfies (8,128)
    num_row_tiles = pl.cdiv(R, tile_rows)

    # ---- optional H*W reduction tiling when even a minimal row tile is too big ----
    if tile_rows * HW * itemsize > block_bytes and HW > 128:
        cols_fit = max(128, block_bytes // (tile_rows * itemsize))
        tile_cols = min((cols_fit // 128) * 128, HW)
    else:
        tile_cols = HW
    num_col_tiles = pl.cdiv(HW, tile_cols)
    mask_cols = (num_col_tiles > 1) and (HW % tile_cols != 0)

    kernel = functools.partial(_concat_pool_kernel, hw=HW, tile_cols=tile_cols,
                               mask_cols=mask_cols)

    mx, av = pl.pallas_call(
        kernel,
        out_shape=(jax.ShapeDtypeStruct((R, 1), dtype),   # max pool
                   jax.ShapeDtypeStruct((R, 1), dtype)),  # avg pool
        grid_spec=pltpu.PrefetchScalarGridSpec(
            num_scalar_prefetch=0,
            grid=(num_row_tiles, num_col_tiles),
            in_specs=[pl.BlockSpec((tile_rows, tile_cols), lambda i, k: (i, k))],
            out_specs=(pl.BlockSpec((tile_rows, 1), lambda i, k: (i, 0)),
                       pl.BlockSpec((tile_rows, 1), lambda i, k: (i, 0))),
            scratch_shapes=[pltpu.VMEM((tile_rows, 1), dtype),         # running max
                            pltpu.VMEM((tile_rows, 1), jnp.float32)],  # running sum
        ),
        compiler_params=pltpu.CompilerParams(
            # Row tiles are independent -> shard across v7x's 2 TCs; the H*W
            # axis is a reduction with resident output/accumulators -> arbitrary.
            dimension_semantics=("parallel", "arbitrary"),
            vmem_limit_bytes=32 * 1024 * 1024,
        ),
        cost_estimate=pl.CostEstimate(
            flops=2 * R * HW,
            transcendentals=0,
            bytes_accessed=R * HW * itemsize + 2 * R * itemsize,
        ),
    )(x2)

    mx = mx.reshape(N, C, 1, 1)
    av = av.reshape(N, C, 1, 1)
    # torch.cat([max_pool, avg_pool], dim=1): first C channels = max, next C = avg.
    return jnp.concatenate([mx, av], axis=1)


def _reference(x):
    ref_max = jnp.max(x, axis=(2, 3), keepdims=True)
    ref_avg = jnp.mean(x, axis=(2, 3), keepdims=True)
    return jnp.concatenate([ref_max, ref_avg], axis=1)


if __name__ == "__main__":
    key = jax.random.PRNGKey(0)
    k1, k2 = jax.random.split(key)

    # 1) Small canonical shape (single block, no reduction tiling).
    x = jax.random.normal(k1, (2, 4, 16, 16), dtype=jnp.float32)
    out = jax.block_until_ready(adaptive_concat_pool2d(x))
    assert out.shape == (2, 8, 1, 1), out.shape
    assert jnp.allclose(out, _reference(x), atol=1e-5, rtol=1e-5), "mismatch (small)"

    # 2) Stress the tiled paths: ragged row tiles + ragged/masked H*W reduction
    #    axis, forced by a tiny per-block byte budget.
    x2 = jax.random.normal(k2, (2, 5, 20, 15), dtype=jnp.float32)
    out2 = jax.block_until_ready(adaptive_concat_pool2d(x2, block_bytes=8 * 1024))
    assert out2.shape == (2, 10, 1, 1), out2.shape
    assert jnp.allclose(out2, _reference(x2), atol=1e-5, rtol=1e-5), "mismatch (tiled)"

    print("KERNEL_OK")
</pallas_src>

<mosaic_0001>
module attributes {stable_mosaic.version = 11 : i64} {
  func.func @_concat_pool_kernel(%arg0: i32, %arg1: i32, %arg2: memref<8x256xf32, #tpu.memory_space<vmem>>, %arg3: memref<8x1xf32, #tpu.memory_space<vmem>>, %arg4: memref<8x1xf32, #tpu.memory_space<vmem>>, %arg5: memref<8x1xf32, #tpu.memory_space<vmem>>, %arg6: memref<8x1xf32, #tpu.memory_space<vmem>>) attributes {dimension_semantics = [#tpu.dimension_semantics<parallel>, #tpu.dimension_semantics<arbitrary>], iteration_bounds = array<i64: 1, 1>, scalar_prefetch = 0 : i64, scratch_operands = 2 : i64, tpu.core_type = #tpu.core_type<tc>, window_params = [{transform_indices = @transform_0, window_bounds = array<i64: 8, 256>}, {transform_indices = @transform_1, window_bounds = array<i64: 8, 1>}, {transform_indices = @transform_2, window_bounds = array<i64: 8, 1>}]} {
    %c0_i32 = arith.constant 0 : i32
    %0 = arith.cmpi eq, %arg1, %c0_i32 : i32
    %1 = arith.extui %0 : i1 to i32
    %c0_i32_0 = arith.constant 0 : i32
    %2 = arith.cmpi ne, %1, %c0_i32_0 : i32
    scf.if %2 {
      %cst_13 = arith.constant 0xFF800000 : f32
      %17 = vector.broadcast %cst_13 : f32 to vector<8x1xf32>
      %c0_14 = arith.constant 0 : index
      %c0_15 = arith.constant 0 : index
      %18 = vector.load %arg5[%c0_14, %c0_15] : memref<8x1xf32, #tpu.memory_space<vmem>>, vector<8x1xf32>
      tpu.vector_store %arg5[%c0_14, %c0_15], %17 {strides = array<i32>} : memref<8x1xf32, #tpu.memory_space<vmem>>, vector<8x1xf32>,
      %cst_16 = arith.constant 0.000000e+00 : f32
      %19 = vector.broadcast %cst_16 : f32 to vector<8x1xf32>
      %c0_17 = arith.constant 0 : index
      %c0_18 = arith.constant 0 : index
      %20 = vector.load %arg6[%c0_17, %c0_18] : memref<8x1xf32, #tpu.memory_space<vmem>>, vector<8x1xf32>
      tpu.vector_store %arg6[%c0_17, %c0_18], %19 {strides = array<i32>} : memref<8x1xf32, #tpu.memory_space<vmem>>, vector<8x1xf32>,
    } else {
    }
    %c0 = arith.constant 0 : index
    %c0_1 = arith.constant 0 : index
    %3 = vector.load %arg2[%c0, %c0_1] : memref<8x256xf32, #tpu.memory_space<vmem>>, vector<8x256xf32>
    %c0_2 = arith.constant 0 : index
    %c0_3 = arith.constant 0 : index
    %4 = vector.load %arg5[%c0_2, %c0_3] : memref<8x1xf32, #tpu.memory_space<vmem>>, vector<8x1xf32>
    %cst = arith.constant dense<0xFF800000> : vector<8xf32>
    %5 = vector.multi_reduction <maximumf>, %3, %cst [1] : vector<8x256xf32> to vector<8xf32>
    %6 = vector.shape_cast %5 : vector<8xf32> to vector<8x1xf32>
    %7 = arith.maximumf %4, %6 : vector<8x1xf32>
    %c0_4 = arith.constant 0 : index
    %c0_5 = arith.constant 0 : index
    %8 = vector.load %arg5[%c0_4, %c0_5] : memref<8x1xf32, #tpu.memory_space<vmem>>, vector<8x1xf32>
    tpu.vector_store %arg5[%c0_4, %c0_5], %7 {strides = array<i32>} : memref<8x1xf32, #tpu.memory_space<vmem>>, vector<8x1xf32>,
    %c0_6 = arith.constant 0 : index
    %c0_7 = arith.constant 0 : index
    %9 = vector.load %arg6[%c0_6, %c0_7] : memref<8x1xf32, #tpu.memory_space<vmem>>, vector<8x1xf32>
    %cst_8 = arith.constant dense<0.000000e+00> : vector<8xf32>
    %10 = vector.multi_reduction <add>, %3, %cst_8 [1] : vector<8x256xf32> to vector<8xf32>
    %11 = vector.shape_cast %10 : vector<8xf32> to vector<8x1xf32>
    %12 = arith.addf %9, %11 : vector<8x1xf32>
    %c0_9 = arith.constant 0 : index
    %c0_10 = arith.constant 0 : index
    %13 = vector.load %arg6[%c0_9, %c0_10] : memref<8x1xf32, #tpu.memory_space<vmem>>, vector<8x1xf32>
    tpu.vector_store %arg6[%c0_9, %c0_10], %12 {strides = array<i32>} : memref<8x1xf32, #tpu.memory_space<vmem>>, vector<8x1xf32>,
    %c0_i32_11 = arith.constant 0 : i32
    %14 = arith.cmpi eq, %arg1, %c0_i32_11 : i32
    %15 = arith.extui %14 : i1 to i32
    %c0_i32_12 = arith.constant 0 : i32
    %16 = arith.cmpi ne, %15, %c0_i32_12 : i32
    scf.if %16 {
      %c0_13 = arith.constant 0 : index
      %c0_14 = arith.constant 0 : index
      %17 = vector.load %arg5[%c0_13, %c0_14] : memref<8x1xf32, #tpu.memory_space<vmem>>, vector<8x1xf32>
      %c0_15 = arith.constant 0 : index
      %c0_16 = arith.constant 0 : index
      %18 = vector.load %arg3[%c0_15, %c0_16] : memref<8x1xf32, #tpu.memory_space<vmem>>, vector<8x1xf32>
      tpu.vector_store %arg3[%c0_15, %c0_16], %17 {strides = array<i32>} : memref<8x1xf32, #tpu.memory_space<vmem>>, vector<8x1xf32>,
      %c0_17 = arith.constant 0 : index
      %c0_18 = arith.constant 0 : index
      %19 = vector.load %arg6[%c0_17, %c0_18] : memref<8x1xf32, #tpu.memory_space<vmem>>, vector<8x1xf32>
      %cst_19 = arith.constant 3.906250e-03 : f32
      %20 = vector.broadcast %cst_19 : f32 to vector<8x1xf32>
      %21 = arith.mulf %19, %20 : vector<8x1xf32>
      %c0_20 = arith.constant 0 : index
      %c0_21 = arith.constant 0 : index
      %22 = vector.load %arg4[%c0_20, %c0_21] : memref<8x1xf32, #tpu.memory_space<vmem>>, vector<8x1xf32>
      tpu.vector_store %arg4[%c0_20, %c0_21], %21 {strides = array<i32>} : memref<8x1xf32, #tpu.memory_space<vmem>>, vector<8x1xf32>,
    } else {
    }
    return
  }
  func.func @transform_0(%arg0: i32, %arg1: i32) -> (i32, i32) {
    %c0_i32 = arith.constant 0 : i32
    return %arg0, %arg1 : i32, i32
  }
  func.func @transform_1(%arg0: i32, %arg1: i32) -> (i32, i32) {
    %c0_i32 = arith.constant 0 : i32
    %c0_i32_0 = arith.constant 0 : i32
    return %arg0, %c0_i32 : i32, i32
  }
  func.func @transform_2(%arg0: i32, %arg1: i32) -> (i32, i32) {
    %c0_i32 = arith.constant 0 : i32
    %c0_i32_0 = arith.constant 0 : i32
    return %arg0, %c0_i32 : i32, i32
  }
}

</mosaic_0001>

<llo_original>
// kernel: tpu_custom_call.1
$region0: #{tpu_custom_call.1}
  #allocation0 [shape = 'u32[]', space=smem, size = 0x4, offset = 0x4, fixed_abs, tag = 'smem constant byte address 0x4 - core index']
  #allocation1 [shape = 'u32[144,128]{1,0:T(1,128)}', space=vmem, size = 0x12000, scoped, tag = 'internal scratch']
  #allocation2 [shape = 'f32[8,1]{1,0:T(8,128)}', space=vmem, size = 0x1000, scoped, tag = 'scratch operand']
  #allocation3 [shape = 'f32[8,1]{1,0:T(8,128)}', space=vmem, size = 0x1000, scoped, tag = 'scratch operand']
  %s0 = inlined_call_operand.hbm [shape: f32[8,256], index: 0, kind: input, shape index: {}]
  %s1 = inlined_call_operand.vmem [shape: f32[8,1], index: 1, kind: output, shape index: {0}]
  %s2 = inlined_call_operand.vmem [shape: f32[8,1], index: 2, kind: output, shape index: {1}]
  %3 = xla_tuple %s1, %s2
  %s4 = sld [smem:[#allocation0]]
  $region34: #{tpu_custom_call.1} parent=0
    _
  %s6 = ssub.s32 1, %s4
  %s7 = scalar_select 0, %s6, %s4
  $region1: #{tpu_custom_call.1} parent=0
    #allocation4 [shape = 'u8[8192]{0}', space=vmem, size = 0x2000, scoped, tag = 'input window, operand 0, single buffered']
    #allocation5 [shape = 's32[1]{0}', space=sflag, size = 0x4, scoped, tag = 'scoped memory for tpu_custom_call.1']
    %8 = vsyncpa [#allocation5], 0
    // Predicated region
    $region2: #{tpu_custom_call.1} parent=1 // pred_check
      _
    $region3: #{tpu_custom_call.1} parent=1 // pred_check_branch
      %10 = sbr.rel (0) target = $region5
    $region4: #{tpu_custom_call.1} parent=1 // pred_region
      %s12 = ssub.s32 256, 256
      %13 = vsyncadd [#allocation5], %s12
      %s15 = sshll.u32 [#allocation4], 4
      %s16 = int_to_ptr.vmem [resolvable:$true] %s15
      %18 = dma.hbm_to_vmem [thread:$0]  %s0, 256, %s16, [#allocation5]
    $region5: #{tpu_custom_call.1} parent=1 // pred_fallthru
      _
    // Predicated region
    $region6: #{tpu_custom_call.1} parent=1 // pred_check
      _
    $region7: #{tpu_custom_call.1} parent=1 // pred_check_branch
      %20 = sbr.rel (0) target = $region9
    $region8: #{tpu_custom_call.1} parent=1 // pred_region
      %21 = dma.done [#allocation5], 256
    $region9: #{tpu_custom_call.1} parent=1 // pred_fallthru
      _
    %p22 = scmp.eq.s32.totalorder 0, 0
    // Predicated region
    $region10: #{tpu_custom_call.1} parent=1 // pred_check
      %p23 = pneg %p22
    $region11: #{tpu_custom_call.1} parent=1 // pred_check_branch
      %25 = sbr.rel (%p23) target = $region13
    $region12: #{tpu_custom_call.1} parent=1 // pred_region
      %vm26 = vcmask 7168
      %27 = vst.msk [vmem:[#allocation2] sm:$0xff] %vm26, -inf
      %28 = vst.msk [vmem:[#allocation3] sm:$0xff] %vm26, 0.0
    $region13: #{tpu_custom_call.1} parent=1 // pred_fallthru
      _
    %v29 = vld [vmem:[#allocation4] sm:$0xff]
    %v30 = vld [vmem:[#allocation4 + $0x8] sm:$0xff]
    %v31 = vld [vmem:[#allocation2] sm:$0xff]
    %v32 = vmax.f32 %v29, %v30
    %33 = vmax.xlane.f32.xlu0 %v32
    %v34 = vpop.xlane.xlu0 %33
    %v35 = vmax.f32 %v31, %v34
    %vm36 = vcmask 7168
    %37 = vst.msk [vmem:[#allocation2] sm:$0xff] %vm36, %v35
    %v38 = vld [vmem:[#allocation3] sm:$0xff]
    %v39 = vadd.f32 %v29, %v30
    %40 = vadd.xlane.f32.xlu0 %v39
    %v41 = vpop.xlane.xlu0 %40
    %v42 = vadd.f32 %v38, %v41
    %43 = vst.msk [vmem:[#allocation3] sm:$0xff] %vm36, %v42
    // Predicated region
    $region14: #{tpu_custom_call.1} parent=1 // pred_check
      %p44 = pneg %p22
    $region15: #{tpu_custom_call.1} parent=1 // pred_check_branch
      %46 = sbr.rel (%p44) target = $region17
    $region16: #{tpu_custom_call.1} parent=1 // pred_region
      %v47 = vld [vmem:[#allocation2] sm:$0xff]
      %48 = vst.msk [vmem:[%s1] sm:$0xff] %vm36, %v47
      %v49 = vld [vmem:[#allocation3] sm:$0xff]
      %v50 = vmul.f32 %v49, 0.00390625
      %51 = vst.msk [vmem:[%s2] sm:$0xff] %vm36, %v50
    $region17: #{tpu_custom_call.1} parent=1 // pred_fallthru
      _
    // Predicated region
    $region18: #{tpu_custom_call.1} parent=1 // pred_check
      _
    $region19: #{tpu_custom_call.1} parent=1 // pred_check_branch
      %53 = sbr.rel (0) target = $region21
    $region20: #{tpu_custom_call.1} parent=1 // pred_region
      _
    $region21: #{tpu_custom_call.1} parent=1 // pred_fallthru
      _
    // Predicated region
    $region22: #{tpu_custom_call.1} parent=1 // pred_check
      _
    $region23: #{tpu_custom_call.1} parent=1 // pred_check_branch
      %55 = sbr.rel (0) target = $region25
    $region24: #{tpu_custom_call.1} parent=1 // pred_region
      _
    $region25: #{tpu_custom_call.1} parent=1 // pred_fallthru
      _
    // Predicated region
    $region26: #{tpu_custom_call.1} parent=1 // pred_check
      _
    $region27: #{tpu_custom_call.1} parent=1 // pred_check_branch
      %57 = sbr.rel (0) target = $region29
    $region28: #{tpu_custom_call.1} parent=1 // pred_region
      _
    $region29: #{tpu_custom_call.1} parent=1 // pred_fallthru
      _
    // Predicated region
    $region30: #{tpu_custom_call.1} parent=1 // pred_check
      _
    $region31: #{tpu_custom_call.1} parent=1 // pred_check_branch
      %59 = sbr.rel (0) target = $region33
    $region32: #{tpu_custom_call.1} parent=1 // pred_region
      _
    $region33: #{tpu_custom_call.1} parent=1 // pred_fallthru
      _
    %60 = vsyncpa [#allocation5], 1

</llo_original>
